<compile_context>
chip_gen: v7x
topology: tpu7x:2x2x1
jax: 0.10.0
libtpu: 0.0.40
codegen_flags: <defaults>
</compile_context>

<pallas_src>
import functools

import jax
import jax.numpy as jnp
from jax.experimental import pallas as pl
from jax.experimental.pallas import tpu as pltpu


def _decoder_kernel(x_ref, w_ref, b_ref, o_ref):
    # One fused MXU pass over the full K (= hidden*2 + memory) with f32
    # accumulation, plus a VPU bias add.  Every operand is a single
    # VMEM-resident block.
    acc = jnp.dot(x_ref[...], w_ref[...], preferred_element_type=jnp.float32)
    o_ref[...] = (acc + b_ref[...]).astype(o_ref.dtype)


def _round_up(x, m):
    return ((x + m - 1) // m) * m


def prepare_decoder_params(weight, bias, *, param_dtype=jnp.bfloat16):
    """One-time parameter preprocessing, hoisted out of the per-call path.

    weight: (ecoc_size, in_features)  -- nn.Linear layout
    bias:   (ecoc_size,)
    Returns:
      w_t: (in_features, ecoc_pad) in param_dtype, ecoc_pad = round_up(ecoc, 128)
      b2:  (1, ecoc_pad) float32
    """
    ecoc_size, _ = weight.shape
    ecoc_pad = _round_up(ecoc_size, 128)
    w_t = jnp.transpose(weight).astype(param_dtype)   # (in_features, ecoc)
    b2 = bias.reshape(1, -1).astype(jnp.float32)      # (1, ecoc)
    if ecoc_pad != ecoc_size:
        # Pad N up to a lane-dense multiple of 128 (unmasked vst on the store path).
        w_t = jnp.pad(w_t, ((0, 0), (0, ecoc_pad - ecoc_size)))
        b2 = jnp.pad(b2, ((0, 0), (0, ecoc_pad - ecoc_size)))
    return jax.device_put(w_t), jax.device_put(b2)


@functools.partial(jax.jit, static_argnames=("ecoc_size",))
def decoder_forward(encoder_hidden, memory, w_t, b2, ecoc_size):
    """Pallas equivalent of Decoder.forward.

    encoder_hidden: any shape flattening to hidden_size*2 (e.g. (2, 1, H))
    memory:         any shape flattening to memory_size
    w_t, b2:        outputs of prepare_decoder_params (preprocessed once)
    returns:        (1, ecoc_size) float32
    """
    in_features, ecoc_pad = w_t.shape

    # Per-call glue: flatten + concat the (tiny) activations and cast to the
    # weight dtype so the MXU does a single bf16 x bf16 -> f32 K-pass.
    x = jnp.concatenate(
        [encoder_hidden.reshape(1, -1), memory.reshape(1, -1)], axis=1
    ).astype(w_t.dtype)
    assert x.shape == (1, in_features)

    # Tiny shapes: single grid point, every operand is one full-array block
    # (full-array block shapes satisfy the TPU tiling rule).
    full = lambda shape: pl.BlockSpec(shape, lambda: tuple(0 for _ in shape))
    out = pl.pallas_call(
        _decoder_kernel,
        out_shape=jax.ShapeDtypeStruct((1, ecoc_pad), jnp.float32),
        grid_spec=pltpu.PrefetchScalarGridSpec(
            num_scalar_prefetch=0,
            grid=(),
            in_specs=[full(x.shape), full(w_t.shape), full(b2.shape)],
            out_specs=full((1, ecoc_pad)),
        ),
    )(x, w_t, b2)

    if ecoc_pad != ecoc_size:
        out = out[:, :ecoc_size]
    return out


if __name__ == "__main__":
    hidden_size = 32
    memory_size = 64
    ecoc_size = 128
    in_features = hidden_size * 2 + memory_size

    key = jax.random.PRNGKey(0)
    k_h, k_m, k_w, k_b = jax.random.split(key, 4)

    # encoder_hidden like a bidirectional RNN hidden state: (2, batch=1, hidden)
    encoder_hidden = jax.random.normal(k_h, (2, 1, hidden_size), dtype=jnp.float32)
    memory = jax.random.normal(k_m, (1, memory_size), dtype=jnp.float32)

    # Deterministic nn.Linear-style parameters (uniform(-1/sqrt(in), 1/sqrt(in))).
    bound = 1.0 / (in_features ** 0.5)
    weight = jax.random.uniform(k_w, (ecoc_size, in_features),
                                minval=-bound, maxval=bound, dtype=jnp.float32)
    bias = jax.random.uniform(k_b, (ecoc_size,),
                              minval=-bound, maxval=bound, dtype=jnp.float32)

    # One-time parameter preprocessing (transpose / pad / bf16 cast), hoisted
    # out of the per-call path.
    w_t, b2 = prepare_decoder_params(weight, bias, param_dtype=jnp.bfloat16)

    out = decoder_forward(encoder_hidden, memory, w_t, b2, ecoc_size)
    out = jax.block_until_ready(out)
    assert out.shape == (1, ecoc_size)

    # Reference 1: exact PyTorch-module math in f32 (loose tolerance covers the
    # bf16 storage of weight/activations).
    ref_in = jnp.concatenate(
        [encoder_hidden.reshape(1, -1), memory.reshape(1, -1)], axis=1)
    ref_f32 = ref_in @ weight.T + bias
    assert jnp.allclose(out, ref_f32, atol=5e-2, rtol=5e-2)

    # Reference 2: same bf16-quantized operands with f32 accumulation -- should
    # match the kernel almost exactly.
    ref_bf16 = (ref_in.astype(jnp.bfloat16).astype(jnp.float32)
                @ weight.astype(jnp.bfloat16).astype(jnp.float32).T) + bias
    assert jnp.allclose(out, ref_bf16, atol=1e-4, rtol=1e-4)

    print("KERNEL_OK")
</pallas_src>

<mosaic_0001>
module attributes {stable_mosaic.version = 11 : i64} {
  func.func @_decoder_kernel(%arg0: memref<1x128xbf16, #tpu.memory_space<vmem>>, %arg1: memref<128x128xbf16, #tpu.memory_space<vmem>>, %arg2: memref<1x128xf32, #tpu.memory_space<vmem>>, %arg3: memref<1x128xf32, #tpu.memory_space<vmem>>) attributes {dimension_semantics = [], scalar_prefetch = 0 : i64, scratch_operands = 0 : i64, tpu.core_type = #tpu.core_type<tc>} {
    %c0 = arith.constant 0 : index
    %c0_0 = arith.constant 0 : index
    %0 = vector.load %arg0[%c0, %c0_0] : memref<1x128xbf16, #tpu.memory_space<vmem>>, vector<1x128xbf16>
    %c0_1 = arith.constant 0 : index
    %c0_2 = arith.constant 0 : index
    %1 = vector.load %arg1[%c0_1, %c0_2] : memref<128x128xbf16, #tpu.memory_space<vmem>>, vector<128x128xbf16>
    %cst = arith.constant dense<0.000000e+00> : vector<1x128xf32>
    %2 = tpu.matmul %0, %1, %cst {dimension_numbers = #tpu.dot_dimension_numbers<[1], [0], [0], [1], [0, 0, 1, 1], [], []>} : vector<1x128xbf16>, vector<128x128xbf16>, vector<1x128xf32> -> vector<1x128xf32>
    %c0_3 = arith.constant 0 : index
    %c0_4 = arith.constant 0 : index
    %3 = vector.load %arg2[%c0_3, %c0_4] : memref<1x128xf32, #tpu.memory_space<vmem>>, vector<1x128xf32>
    %4 = arith.addf %2, %3 : vector<1x128xf32>
    %c0_5 = arith.constant 0 : index
    %c0_6 = arith.constant 0 : index
    %5 = vector.load %arg3[%c0_5, %c0_6] : memref<1x128xf32, #tpu.memory_space<vmem>>, vector<1x128xf32>
    tpu.vector_store %arg3[%c0_5, %c0_6], %4 {strides = array<i32>} : memref<1x128xf32, #tpu.memory_space<vmem>>, vector<1x128xf32>,
    return
  }
}

</mosaic_0001>

<llo_original>
// kernel: decoder_forward.1
$region0: #{decoder_forward.1}
  #allocation0 [shape = 'u32[]', space=smem, size = 0x4, offset = 0x4, fixed_abs, tag = 'smem constant byte address 0x4 - core index']
  #allocation1 [shape = 'u32[144,128]{1,0:T(1,128)}', space=vmem, size = 0x12000, scoped, tag = 'internal scratch']
  %s0 = inlined_call_operand.vmem [shape: bf16[1,128], index: 0, kind: input, shape index: {}]
  %s1 = inlined_call_operand.hbm [shape: bf16[128,128], index: 1, kind: input, shape index: {}]
  %s2 = inlined_call_operand.vmem [shape: f32[1,128], index: 2, kind: input, shape index: {}]
  %s3 = inlined_call_operand.hbm [shape: f32[1,128], index: 3, kind: output, shape index: {}]
  %s4 = sld [smem:[#allocation0]]
  $region26: #{decoder_forward.1} parent=0
    _
  %s6 = ssub.s32 1, %s4
  %s7 = scalar_select 0, %s6, %s4
  $region1: #{decoder_forward.1} parent=0
    #allocation2 [shape = 'u8[32768]{0}', space=vmem, size = 0x8000, scoped, tag = 'input window, operand 1, single buffered']
    #allocation3 [shape = 's32[1]{0}', space=sflag, size = 0x4, scoped, tag = 'scoped memory for decoder_forward.1']
    #allocation4 [shape = 's32[1]{0}', space=sflag, size = 0x4, scoped, tag = 'scoped memory for decoder_forward.1']
    #allocation5 [shape = 'u8[512]{0}', space=vmem, size = 0x400, scoped, tag = 'output window, operand 0, single buffered']
    %8 = vsyncpa [#allocation3], 0
    %9 = vsyncpa [#allocation4], 0
    // Predicated region
    $region2: #{decoder_forward.1} parent=1 // pred_check
      _
    $region3: #{decoder_forward.1} parent=1 // pred_check_branch
      %11 = sbr.rel (0) target = $region5
    $region4: #{decoder_forward.1} parent=1 // pred_region
      _
    $region5: #{decoder_forward.1} parent=1 // pred_fallthru
      _
    // Predicated region
    $region6: #{decoder_forward.1} parent=1 // pred_check
      _
    $region7: #{decoder_forward.1} parent=1 // pred_check_branch
      %13 = sbr.rel (0) target = $region9
    $region8: #{decoder_forward.1} parent=1 // pred_region
      %s15 = ssub.s32 1024, 1024
      %16 = vsyncadd [#allocation3], %s15
      %s17 = sshll.u32 [#allocation2], 4
      %s18 = int_to_ptr.vmem [resolvable:$true] %s17
      %23 = dma.hbm_to_vmem [thread:$0]  %s1, 1024, %s18, [#allocation3], 64, 64, 4
    $region9: #{decoder_forward.1} parent=1 // pred_fallthru
      _
    // Predicated region
    $region10: #{decoder_forward.1} parent=1 // pred_check
      _
    $region11: #{decoder_forward.1} parent=1 // pred_check_branch
      %25 = sbr.rel (0) target = $region13
    $region12: #{decoder_forward.1} parent=1 // pred_region
      _
    $region13: #{decoder_forward.1} parent=1 // pred_fallthru
      _
    // Predicated region
    $region14: #{decoder_forward.1} parent=1 // pred_check
      _
    $region15: #{decoder_forward.1} parent=1 // pred_check_branch
      %27 = sbr.rel (0) target = $region17
    $region16: #{decoder_forward.1} parent=1 // pred_region
      %28 = dma.done [#allocation3], 1024
    $region17: #{decoder_forward.1} parent=1 // pred_fallthru
      _
    %v30 = vld [vmem:[%s0] sm:$0x1]
    %v31 = vld [vmem:[#allocation2] sm:$0xf]
    %v32 = vld [vmem:[#allocation2 + $0x4] sm:$0xf]
    %v33 = vld [vmem:[#allocation2 + $0x8] sm:$0xf]
    %v34 = vld [vmem:[#allocation2 + $0xc] sm:$0xf]
    %v35 = vld [vmem:[#allocation2 + $0x10] sm:$0xf]
    %v36 = vld [vmem:[#allocation2 + $0x14] sm:$0xf]
    %v37 = vld [vmem:[#allocation2 + $0x18] sm:$0xf]
    %v38 = vld [vmem:[#allocation2 + $0x1c] sm:$0xf]
    %v39 = vld [vmem:[#allocation2 + $0x20] sm:$0xf]
    %v40 = vld [vmem:[#allocation2 + $0x24] sm:$0xf]
    %v41 = vld [vmem:[#allocation2 + $0x28] sm:$0xf]
    %v42 = vld [vmem:[#allocation2 + $0x2c] sm:$0xf]
    %v43 = vld [vmem:[#allocation2 + $0x30] sm:$0xf]
    %v44 = vld [vmem:[#allocation2 + $0x34] sm:$0xf]
    %v45 = vld [vmem:[#allocation2 + $0x38] sm:$0xf]
    %v46 = vld [vmem:[#allocation2 + $0x3c] sm:$0xf]
    %v47 = vld [vmem:[%s2] sm:$0x1]
    %v64 = vunpack.c.l.b16 %v31
    %v65 = vunpack.c.l.b16 %v32
    %v66 = vunpack.c.l.b16 %v33
    %v67 = vunpack.c.l.b16 %v34
    %v68 = vunpack.c.l.b16 %v35
    %v69 = vunpack.c.l.b16 %v36
    %v70 = vunpack.c.l.b16 %v37
    %v71 = vunpack.c.l.b16 %v38
    %v72 = vunpack.c.l.b16 %v39
    %v73 = vunpack.c.l.b16 %v40
    %v74 = vunpack.c.l.b16 %v41
    %v75 = vunpack.c.l.b16 %v42
    %v76 = vunpack.c.l.b16 %v43
    %v77 = vunpack.c.l.b16 %v44
    %v78 = vunpack.c.l.b16 %v45
    %v79 = vunpack.c.l.b16 %v46
    %v80 = vpack.c.b16 %v65, %v64
    %v81 = vpack.c.b16 %v67, %v66
    %v82 = vpack.c.b16 %v69, %v68
    %v83 = vpack.c.b16 %v71, %v70
    %v84 = vpack.c.b16 %v73, %v72
    %v85 = vpack.c.b16 %v75, %v74
    %v86 = vpack.c.b16 %v77, %v76
    %v87 = vpack.c.b16 %v79, %v78
    %96 = vmatprep.subr.bf16.mxu0 0
    %97 = vmatpush1.bf16.msra.mxu0 %v80
    %98 = vmatprep.subr.bf16.mxu0 0
    %99 = vmatpush1.bf16.msra.mxu0 %v81
    %100 = vmatprep.subr.bf16.mxu0 0
    %101 = vmatpush1.bf16.msra.mxu0 %v82
    %102 = vmatprep.subr.bf16.mxu0 0
    %103 = vmatpush1.bf16.msra.mxu0 %v83
    %104 = vmatprep.subr.bf16.mxu0 0
    %105 = vmatpush1.bf16.msra.mxu0 %v84
    %106 = vmatprep.subr.bf16.mxu0 0
    %107 = vmatpush1.bf16.msra.mxu0 %v85
    %108 = vmatprep.subr.bf16.mxu0 0
    %109 = vmatpush1.bf16.msra.mxu0 %v86
    %110 = vmatprep.subr.bf16.mxu0 0
    %111 = vmatpush1.bf16.msra.mxu0 %v87
    %112 = vmatprep.subr.bf16.mxu0 0
    %113 = vmatpush1.bf16.msra.mxu0 0
    %114 = vmatprep.subr.bf16.mxu0 0
    %115 = vmatpush1.bf16.msra.mxu0 0
    %116 = vmatprep.subr.bf16.mxu0 0
    %117 = vmatpush1.bf16.msra.mxu0 0
    %118 = vmatprep.subr.bf16.mxu0 0
    %119 = vmatpush1.bf16.msra.mxu0 0
    %120 = vmatprep.subr.bf16.mxu0 0
    %121 = vmatpush1.bf16.msra.mxu0 0
    %122 = vmatprep.subr.bf16.mxu0 0
    %123 = vmatpush1.bf16.msra.mxu0 0
    %124 = vmatprep.subr.bf16.mxu0 0
    %125 = vmatpush1.bf16.msra.mxu0 0
    %126 = vmatprep.subr.bf16.mxu0 0
    %127 = vmatpush1.bf16.msra.mxu0 0
    %128 = vmatprep.mubr.bf16.mxu0 0
    %129 = vmatmul.mubr.bf16.gmra.mrb[0].mxu0 %v30
    %v130 = vpop.f32.mrb[0].mxu0
    %v131 = vadd.f32 %v47, %v130
    %v132 = vpop.f32.mrb[0].mxu0
    %v133 = vpop.f32.mrb[0].mxu0
    %v134 = vpop.f32.mrb[0].mxu0
    %135 = vdwg.mxu0
    %136 = vst [vmem:[#allocation5] sm:$0x1] %v131
    // Predicated region
    $region18: #{decoder_forward.1} parent=1 // pred_check
      _
    $region19: #{decoder_forward.1} parent=1 // pred_check_branch
      %138 = sbr.rel (0) target = $region21
    $region20: #{decoder_forward.1} parent=1 // pred_region
      %s140 = ssub.s32 16, 16
      %141 = vsyncadd [#allocation4], %s140
      %s143 = sshll.u32 [#allocation5], 4
      %s144 = int_to_ptr.vmem [resolvable:$true] %s143
      %146 = dma.vmem_to_hbm [thread:$0]  %s144, 16, %s3, [#allocation4]
    $region21: #{decoder_forward.1} parent=1 // pred_fallthru
      _
    // Predicated region
    $region22: #{decoder_forward.1} parent=1 // pred_check
      _
    $region23: #{decoder_forward.1} parent=1 // pred_check_branch
      %148 = sbr.rel (0) target = $region25
    $region24: #{decoder_forward.1} parent=1 // pred_region
      %149 = dma.done [#allocation4], 16
    $region25: #{decoder_forward.1} parent=1 // pred_fallthru
      _
    %150 = vsyncpa [#allocation3], 1
    %151 = vsyncpa [#allocation4], 1

</llo_original>
